<compile_context>
chip_gen: v5e
topology: v5e:2x2
jax: 0.10.0
libtpu: 0.0.40
codegen_flags: <defaults>
</compile_context>

<pallas_src>
import functools

import jax
import jax.numpy as jnp
from jax import lax
from jax.experimental import pallas as pl
from jax.experimental.pallas import tpu as pltpu


_PALLAS_MIN_ELEMS = 65536          # below this the fused-XLA path wins on dispatch cost
_STRIP_ROWS = 8                    # sublane-aligned strip; whole chain stays in vregs


def _cdiv(a, b):
    return -(-a // b)


def _chain(s, p):
    """Constant-folded Yarotsky forward applied elementwise to `s`."""
    h2 = None
    for r in range(1, p):
        s = 2.0 * jnp.minimum(jnp.maximum(s, 0.0), 1.0 - s)   # T(s), exact tent identity
        t = s * (0.25 ** r)                                    # exact power-of-two scale
        h2 = jnp.maximum(t if h2 is None else t + h2, 0.0)
    s = 2.0 * jnp.minimum(jnp.maximum(s, 0.0), 1.0 - s)
    y = s * (0.25 ** p)
    return y if h2 is None else y + h2


def _yarotsky_kernel(x_ref, o_ref, *, p):
    nstrips = x_ref.shape[0] // _STRIP_ROWS

    def strip_body(k, carry):
        r0 = pl.multiple_of(k * _STRIP_ROWS, _STRIP_ROWS)
        s = x_ref[pl.ds(r0, _STRIP_ROWS), :]
        o_ref[pl.ds(r0, _STRIP_ROWS), :] = _chain(s, p)
        return carry

    lax.fori_loop(0, nstrips, strip_body, 0, unroll=True)


def yarotsky_forward(x, p, *, force_pallas=False):
    """Pallas TPU version of YarotskyNetwork(p).forward, applied per scalar element."""
    x = jnp.asarray(x, jnp.float32)
    orig_shape = x.shape
    n = max(1, x.size)

    if n < _PALLAS_MIN_ELEMS and not force_pallas:
        # Tiny-input fast path (incl. the torch-native shape (1,)): pad + pallas dispatch
        # + slice would cost several us for nanoseconds of VPU work.
        return jnp.squeeze(_chain(x, p))

    flat = x.reshape(-1)
    cols = 1024 if n >= 1024 else 128
    pad_n = _cdiv(n, cols) * cols
    if pad_n != n:                           # ragged: pad only up to one row multiple
        flat = jnp.pad(flat, (0, pad_n - n))
    rows = pad_n // cols
    x2d = flat.reshape(rows, cols)           # free reshape of a contiguous buffer

    # >= 2 grid steps whenever possible (v7x has 2 TensorCores) with <= 1 MiB blocks and
    # minimal tail padding; the trailing partial row-block is handled by Pallas masking.
    target_blocks = max(2, _cdiv(rows, 256))
    block_rows = _cdiv(_cdiv(rows, target_blocks), _STRIP_ROWS) * _STRIP_ROWS
    block_rows = min(256, max(_STRIP_ROWS, block_rows))
    grid = (_cdiv(rows, block_rows),)

    out = pl.pallas_call(
        functools.partial(_yarotsky_kernel, p=p),
        out_shape=jax.ShapeDtypeStruct((rows, cols), jnp.float32),
        grid=grid,
        in_specs=[pl.BlockSpec((block_rows, cols), lambda i: (i, 0))],
        out_specs=pl.BlockSpec((block_rows, cols), lambda i: (i, 0)),
        compiler_params=pltpu.CompilerParams(
            dimension_semantics=("parallel",),
            vmem_limit_bytes=32 * 1024 * 1024),
    )(x2d)

    out_flat = out.reshape(-1)
    if pad_n != n:
        out_flat = out_flat[:n]
    return jnp.squeeze(out_flat.reshape(orig_shape))   # matches torch .squeeze()


def yarotsky_reference(x, p):
    """Faithful elementwise transcription of the torch forward (explicit weights)."""
    xf = jnp.asarray(x, jnp.float32)
    h = [jax.nn.relu(1.0 * xf + 0.0),
         jax.nn.relu(1.0 * xf - 0.5),
         jax.nn.relu(0.0 * xf + 0.0)]
    for r in range(1, p):
        w = [[2.0, -4.0, 0.0],
             [2.0, -4.0, 0.0],
             [2.0 / 4 ** r, -4.0 / 4 ** r, 1.0]]
        b = [0.0, -0.5, 0.0]
        h = [jax.nn.relu(w[i][0] * h[0] + w[i][1] * h[1] + w[i][2] * h[2] + b[i])
             for i in range(3)]
    wp = [2.0 * 4.0 ** (-p), -4.0 * 4.0 ** (-p), 1.0]
    y = wp[0] * h[0] + wp[1] * h[1] + wp[2] * h[2] + 0.0
    return jnp.squeeze(y)


if __name__ == "__main__":
    key = jax.random.PRNGKey(0)
    # (p, shape, force_pallas, minval, maxval, tol); torch forward itself takes x of shape (1,),
    # the kernel maps that scalar function over batches of independent scalars.
    cases = [
        (4, (8,), True, 0.0, 1.0, 1e-6),           # tiny, forced Pallas, partial block
        (6, (2048,), True, 0.0, 1.0, 1e-6),        # cols=1024, single partial block
        (1, (8,), True, 0.0, 1.0, 1e-6),           # degenerate p=1
        (5, (300, 257), True, 0.0, 1.0, 1e-6),     # ragged -> pad path, 2 grid steps
        (4, (2048,), True, -0.5, 1.5, 1e-5),       # inputs outside [0,1]
        (3, (128, 1024), False, 0.0, 1.0, 1e-6),   # auto path -> Pallas (above threshold, no pad)
        (3, (1,), False, 0.0, 1.0, 1e-6),          # torch-native shape -> jnp fast path
    ]
    for p, shape, force, lo, hi, tol in cases:
        key, sub = jax.random.split(key)
        xv = jax.random.uniform(sub, shape, dtype=jnp.float32, minval=lo, maxval=hi)

        y = jax.block_until_ready(yarotsky_forward(xv, p, force_pallas=force))
        y_ref = yarotsky_reference(xv, p)

        assert y.shape == y_ref.shape, (p, shape, y.shape, y_ref.shape)
        err = float(jnp.max(jnp.abs(y - y_ref)))
        assert jnp.allclose(y, y_ref, atol=tol, rtol=tol), (p, shape, err)
    print("KERNEL_OK")
</pallas_src>

<mosaic_0001>
module attributes {stable_mosaic.version = 11 : i64} {
  func.func @_yarotsky_kernel(%arg0: i32, %arg1: memref<8x128xf32, #tpu.memory_space<vmem>>, %arg2: memref<8x128xf32, #tpu.memory_space<vmem>>) attributes {dimension_semantics = [#tpu.dimension_semantics<parallel>], iteration_bounds = array<i64: 1>, scalar_prefetch = 0 : i64, scratch_operands = 0 : i64, tpu.core_type = #tpu.core_type<tc>, window_params = [{transform_indices = @transform_0, window_bounds = array<i64: 8, 128>}, {transform_indices = @transform_1, window_bounds = array<i64: 8, 128>}]} {
    %c0_i32 = arith.constant 0 : i32
    %c8_i32 = arith.constant 8 : i32
    %0 = arith.muli %c0_i32, %c8_i32 : i32
    %1 = tpu.assume_multiple %0, 8 : i32
    %2 = arith.index_cast %1 : i32 to index
    %c0 = arith.constant 0 : index
    %3 = vector.load %arg1[%2, %c0] : memref<8x128xf32, #tpu.memory_space<vmem>>, vector<8x128xf32>
    %cst = arith.constant 0.000000e+00 : f32
    %4 = vector.broadcast %cst : f32 to vector<8x128xf32>
    %5 = arith.maximumf %3, %4 : vector<8x128xf32>
    %cst_0 = arith.constant 1.000000e+00 : f32
    %6 = vector.broadcast %cst_0 : f32 to vector<8x128xf32>
    %7 = arith.subf %6, %3 : vector<8x128xf32>
    %8 = arith.minimumf %5, %7 : vector<8x128xf32>
    %cst_1 = arith.constant 2.000000e+00 : f32
    %9 = vector.broadcast %cst_1 : f32 to vector<8x128xf32>
    %10 = arith.mulf %9, %8 : vector<8x128xf32>
    %cst_2 = arith.constant 2.500000e-01 : f32
    %11 = vector.broadcast %cst_2 : f32 to vector<8x128xf32>
    %12 = arith.mulf %10, %11 : vector<8x128xf32>
    %cst_3 = arith.constant 0.000000e+00 : f32
    %13 = vector.broadcast %cst_3 : f32 to vector<8x128xf32>
    %14 = arith.maximumf %12, %13 : vector<8x128xf32>
    %cst_4 = arith.constant 0.000000e+00 : f32
    %15 = vector.broadcast %cst_4 : f32 to vector<8x128xf32>
    %16 = arith.maximumf %10, %15 : vector<8x128xf32>
    %cst_5 = arith.constant 1.000000e+00 : f32
    %17 = vector.broadcast %cst_5 : f32 to vector<8x128xf32>
    %18 = arith.subf %17, %10 : vector<8x128xf32>
    %19 = arith.minimumf %16, %18 : vector<8x128xf32>
    %cst_6 = arith.constant 2.000000e+00 : f32
    %20 = vector.broadcast %cst_6 : f32 to vector<8x128xf32>
    %21 = arith.mulf %20, %19 : vector<8x128xf32>
    %cst_7 = arith.constant 6.250000e-02 : f32
    %22 = vector.broadcast %cst_7 : f32 to vector<8x128xf32>
    %23 = arith.mulf %21, %22 : vector<8x128xf32>
    %24 = arith.addf %23, %14 : vector<8x128xf32>
    %cst_8 = arith.constant 0.000000e+00 : f32
    %25 = vector.broadcast %cst_8 : f32 to vector<8x128xf32>
    %26 = arith.maximumf %24, %25 : vector<8x128xf32>
    %cst_9 = arith.constant 0.000000e+00 : f32
    %27 = vector.broadcast %cst_9 : f32 to vector<8x128xf32>
    %28 = arith.maximumf %21, %27 : vector<8x128xf32>
    %cst_10 = arith.constant 1.000000e+00 : f32
    %29 = vector.broadcast %cst_10 : f32 to vector<8x128xf32>
    %30 = arith.subf %29, %21 : vector<8x128xf32>
    %31 = arith.minimumf %28, %30 : vector<8x128xf32>
    %cst_11 = arith.constant 2.000000e+00 : f32
    %32 = vector.broadcast %cst_11 : f32 to vector<8x128xf32>
    %33 = arith.mulf %32, %31 : vector<8x128xf32>
    %cst_12 = arith.constant 1.562500e-02 : f32
    %34 = vector.broadcast %cst_12 : f32 to vector<8x128xf32>
    %35 = arith.mulf %33, %34 : vector<8x128xf32>
    %36 = arith.addf %35, %26 : vector<8x128xf32>
    %cst_13 = arith.constant 0.000000e+00 : f32
    %37 = vector.broadcast %cst_13 : f32 to vector<8x128xf32>
    %38 = arith.maximumf %36, %37 : vector<8x128xf32>
    %cst_14 = arith.constant 0.000000e+00 : f32
    %39 = vector.broadcast %cst_14 : f32 to vector<8x128xf32>
    %40 = arith.maximumf %33, %39 : vector<8x128xf32>
    %cst_15 = arith.constant 1.000000e+00 : f32
    %41 = vector.broadcast %cst_15 : f32 to vector<8x128xf32>
    %42 = arith.subf %41, %33 : vector<8x128xf32>
    %43 = arith.minimumf %40, %42 : vector<8x128xf32>
    %cst_16 = arith.constant 2.000000e+00 : f32
    %44 = vector.broadcast %cst_16 : f32 to vector<8x128xf32>
    %45 = arith.mulf %44, %43 : vector<8x128xf32>
    %cst_17 = arith.constant 3.906250e-03 : f32
    %46 = vector.broadcast %cst_17 : f32 to vector<8x128xf32>
    %47 = arith.mulf %45, %46 : vector<8x128xf32>
    %48 = arith.addf %47, %38 : vector<8x128xf32>
    %49 = arith.index_cast %1 : i32 to index
    %c0_18 = arith.constant 0 : index
    %50 = vector.load %arg2[%49, %c0_18] : memref<8x128xf32, #tpu.memory_space<vmem>>, vector<8x128xf32>
    tpu.vector_store %arg2[%49, %c0_18], %48 {strides = array<i32>} : memref<8x128xf32, #tpu.memory_space<vmem>>, vector<8x128xf32>,
    %c1_i32 = arith.constant 1 : i32
    return
  }
  func.func @transform_0(%arg0: i32) -> (i32, i32) {
    %c0_i32 = arith.constant 0 : i32
    %c0_i32_0 = arith.constant 0 : i32
    return %arg0, %c0_i32 : i32, i32
  }
  func.func @transform_1(%arg0: i32) -> (i32, i32) {
    %c0_i32 = arith.constant 0 : i32
    %c0_i32_0 = arith.constant 0 : i32
    return %arg0, %c0_i32 : i32, i32
  }
}

</mosaic_0001>

<llo_original>
// kernel: tpu_custom_call.1
$region0: #{tpu_custom_call.1}
  #allocation0 [shape = 'u32[]', space=smem, size = 0x4, offset = 0x4, fixed_abs, tag = 'smem constant byte address 0x4 - core index']
  #allocation1 [shape = 'u32[72,128]{1,0:T(1,128)}', space=vmem, size = 0x9000, scoped, tag = 'internal scratch']
  %s0 = inlined_call_operand.hbm [shape: f32[1,128], index: 0, kind: input, shape index: {}]
  %s1 = inlined_call_operand.hbm [shape: f32[1,128], index: 1, kind: output, shape index: {}]
  %s2 = sld [smem:[#allocation0]]
  $region18: #{tpu_custom_call.1} parent=0
    _
  %s4 = ssub.s32 1, %s2
  %s5 = scalar_select 0, %s4, %s2
  $region1: #{tpu_custom_call.1} parent=0
    #allocation2 [shape = 'u8[4096]{0}', space=vmem, size = 0x1000, scoped, tag = 'input window, operand 0, single buffered']
    #allocation3 [shape = 's32[1]{0}', space=sflag, size = 0x4, scoped, tag = 'scoped memory for tpu_custom_call.1']
    #allocation4 [shape = 's32[1]{0}', space=sflag, size = 0x4, scoped, tag = 'scoped memory for tpu_custom_call.1']
    #allocation5 [shape = 'u8[4096]{0}', space=vmem, size = 0x1000, scoped, tag = 'output window, operand 0, single buffered']
    %6 = vsyncpa [#allocation3], 0
    %7 = vsyncpa [#allocation4], 0
    // Predicated region
    $region2: #{tpu_custom_call.1} parent=1 // pred_check
      _
    $region3: #{tpu_custom_call.1} parent=1 // pred_check_branch
      %9 = sbr.rel (0) target = $region5
    $region4: #{tpu_custom_call.1} parent=1 // pred_region
      %11 = vsyncadd [#allocation3], 112
      %s12 = sshll.u32 %s0, 4
      %s13 = int_to_ptr.hbm [resolvable:$true] %s12
      %s14 = sshll.u32 [#allocation2], 4
      %s15 = int_to_ptr.vmem [resolvable:$true] %s14
      %20 = dma.hbm_to_vmem [thread:$0]  %s13, 16, %s15, [#allocation3], 16, 16, 1
    $region5: #{tpu_custom_call.1} parent=1 // pred_fallthru
      _
    // Predicated region
    $region6: #{tpu_custom_call.1} parent=1 // pred_check
      _
    $region7: #{tpu_custom_call.1} parent=1 // pred_check_branch
      %22 = sbr.rel (0) target = $region9
    $region8: #{tpu_custom_call.1} parent=1 // pred_region
      %24 = dma.done [#allocation3], 128
    $region9: #{tpu_custom_call.1} parent=1 // pred_fallthru
      _
    %v25 = vld [vmem:[#allocation2] sm:$0xff]
    %v26 = vmax.f32 %v25, 0.0
    %v27 = vsub.f32 1.0, %v25
    %v28 = vmin.f32 %v26, %v27
    %v29 = vmul.f32 %v28, 2.0
    %v30 = vmul.f32 %v29, 0.25
    %v31 = vmax.f32 %v30, 0.0
    %v32 = vmax.f32 %v29, 0.0
    %v33 = vsub.f32 1.0, %v29
    %v34 = vmin.f32 %v32, %v33
    %v35 = vmul.f32 %v34, 2.0
    %v36 = vmul.f32 %v35, 0.0625
    %v37 = vadd.f32 %v36, %v31
    %v38 = vmax.f32 %v37, 0.0
    %v39 = vmax.f32 %v35, 0.0
    %v40 = vsub.f32 1.0, %v35
    %v41 = vmin.f32 %v39, %v40
    %v42 = vmul.f32 %v41, 2.0
    %v43 = vmul.f32 %v42, 0.015625
    %v44 = vadd.f32 %v43, %v38
    %v45 = vmax.f32 %v44, 0.0
    %v46 = vmax.f32 %v42, 0.0
    %v47 = vsub.f32 1.0, %v42
    %v48 = vmin.f32 %v46, %v47
    %v49 = vmul.f32 %v48, 2.0
    %v50 = vmul.f32 %v49, 0.00390625
    %v51 = vadd.f32 %v50, %v45
    %52 = vst [vmem:[#allocation5] sm:$0xff] %v51
    // Predicated region
    $region10: #{tpu_custom_call.1} parent=1 // pred_check
      _
    $region11: #{tpu_custom_call.1} parent=1 // pred_check_branch
      %54 = sbr.rel (0) target = $region13
    $region12: #{tpu_custom_call.1} parent=1 // pred_region
      %56 = vsyncadd [#allocation4], 112
      %s57 = sshll.u32 [#allocation5], 4
      %s58 = int_to_ptr.vmem [resolvable:$true] %s57
      %s59 = sshll.u32 %s1, 4
      %s60 = int_to_ptr.hbm [resolvable:$true] %s59
      %65 = dma.vmem_to_hbm [thread:$0]  %s58, 16, %s60, [#allocation4], 16, 16, 1
    $region13: #{tpu_custom_call.1} parent=1 // pred_fallthru
      _
    // Predicated region
    $region14: #{tpu_custom_call.1} parent=1 // pred_check
      _
    $region15: #{tpu_custom_call.1} parent=1 // pred_check_branch
      %67 = sbr.rel (0) target = $region17
    $region16: #{tpu_custom_call.1} parent=1 // pred_region
      %69 = dma.done [#allocation4], 128
    $region17: #{tpu_custom_call.1} parent=1 // pred_fallthru
      _
    %70 = vsyncpa [#allocation3], 1
    %71 = vsyncpa [#allocation4], 1

</llo_original>
